<compile_context>
chip_gen: v7x
topology: tpu7x:2x2x1
jax: 0.10.0
libtpu: 0.0.40
codegen_flags: <defaults>
</compile_context>

<pallas_src>
import functools

import jax
import jax.numpy as jnp
from jax.experimental import pallas as pl
from jax.experimental.pallas import tpu as pltpu

# ----------------- config (scaled-down bert-base) -----------------
VOCAB = 1000
HIDDEN = 768          # kept at 768 so the classifier head is exactly Linear(768, 1)
NUM_LAYERS = 2        # TODO(synk): bert-base-uncased has 12 layers; 2 here for the synthetic run
NUM_HEADS = 12
HEAD_DIM = HIDDEN // NUM_HEADS
INTERMEDIATE = 3072
MAX_POS = 64
LN_EPS = 1e-12


def _default_vmem_limit():
    # v5e/v6e have 128 MiB VMEM per TC, v7x only 64 MiB -> cap the scoped limit accordingly.
    try:
        cap = int(getattr(pltpu.get_tpu_info(), "vmem_capacity_bytes", 64 * 1024 * 1024))
    except Exception:
        cap = 64 * 1024 * 1024
    return max(32 * 1024 * 1024, min(cap // 2, 64 * 1024 * 1024))


_VMEM_LIMIT = _default_vmem_limit()


def _cparams(*dim_sem):
    return pltpu.CompilerParams(
        dimension_semantics=dim_sem,
        vmem_limit_bytes=_VMEM_LIMIT,
    )


def _pick_tile(dim, target, mult):
    """Largest divisor of `dim` that is <= target and a multiple of `mult` (else the full dim)."""
    if dim <= target:
        return dim
    t = (target // mult) * mult
    while t >= mult:
        if dim % t == 0:
            return t
        t -= mult
    return dim


# ----------------- kernels -----------------
def _dense_kernel(x_ref, w_ref, b_ref, o_ref, *, act):
    """y = act(x @ w + b) for one (M-tile, N-tile); f32 accumulate, bf16 store."""
    y = jnp.dot(x_ref[...], w_ref[...], preferred_element_type=jnp.float32)
    y = y + b_ref[...]
    if act == "gelu":
        # TODO(synk): HF BERT uses exact erf-GELU; tanh approximation used here.
        y = jax.nn.gelu(y, approximate=True)
    o_ref[...] = y.astype(o_ref.dtype)


def dense(x, w, b, act="none", out_dtype=jnp.bfloat16):
    M, K = x.shape
    _, N = w.shape
    tm = _pick_tile(M, 256, 8)
    tn = _pick_tile(N, 512, 128)
    kernel = functools.partial(_dense_kernel, act=act)
    return pl.pallas_call(
        kernel,
        out_shape=jax.ShapeDtypeStruct((M, N), out_dtype),
        grid=(M // tm, N // tn),
        in_specs=[
            pl.BlockSpec((tm, K), lambda i, j: (i, 0)),
            pl.BlockSpec((K, tn), lambda i, j: (0, j)),
            pl.BlockSpec((1, tn), lambda i, j: (0, j)),
        ],
        out_specs=pl.BlockSpec((tm, tn), lambda i, j: (i, j)),
        compiler_params=_cparams("parallel", "parallel"),
    )(x, w, b.reshape(1, N))


def _dense_add_ln_kernel(x_ref, w_ref, b_ref, r_ref, g_ref, be_ref, o_ref):
    """y = LayerNorm((x @ w + b) + residual) * gamma + beta  (LN stats in f32)."""
    y = jnp.dot(x_ref[...], w_ref[...], preferred_element_type=jnp.float32)
    y = y + b_ref[...] + r_ref[...].astype(jnp.float32)
    mu = jnp.mean(y, axis=-1, keepdims=True)
    yc = y - mu
    var = jnp.mean(yc * yc, axis=-1, keepdims=True)
    o_ref[...] = (yc * jax.lax.rsqrt(var + LN_EPS) * g_ref[...] + be_ref[...]).astype(o_ref.dtype)


def dense_add_ln(x, w, b, residual, gamma, beta, out_dtype=jnp.bfloat16):
    M, K = x.shape
    _, N = w.shape  # N == HIDDEN: kept full-width so LN reduces over the whole hidden dim
    tm = _pick_tile(M, 256, 8)
    return pl.pallas_call(
        _dense_add_ln_kernel,
        out_shape=jax.ShapeDtypeStruct((M, N), out_dtype),
        grid=(M // tm,),
        in_specs=[
            pl.BlockSpec((tm, K), lambda i: (i, 0)),
            pl.BlockSpec((K, N), lambda i: (0, 0)),
            pl.BlockSpec((1, N), lambda i: (0, 0)),
            pl.BlockSpec((tm, N), lambda i: (i, 0)),
            pl.BlockSpec((1, N), lambda i: (0, 0)),
            pl.BlockSpec((1, N), lambda i: (0, 0)),
        ],
        out_specs=pl.BlockSpec((tm, N), lambda i: (i, 0)),
        compiler_params=_cparams("parallel"),
    )(x, w, b.reshape(1, N), residual, gamma, beta)


def _ffn_fused_kernel(x_ref, wi_ref, bi_ref, wf_ref, bf_ref, r_ref, g_ref, be_ref, o_ref):
    """y = LayerNorm(gelu(x @ Wi + bi) @ Wf + bf + residual) * gamma + beta.

    The (tm, INTERMEDIATE) activation stays in VMEM/vregs -> no HBM round-trip.
    """
    h = jnp.dot(x_ref[...], wi_ref[...], preferred_element_type=jnp.float32)
    # TODO(synk): HF BERT uses exact erf-GELU; tanh approximation used here.
    h = jax.nn.gelu(h + bi_ref[...], approximate=True)
    y = jnp.dot(h.astype(x_ref.dtype), wf_ref[...], preferred_element_type=jnp.float32)
    y = y + bf_ref[...] + r_ref[...].astype(jnp.float32)
    mu = jnp.mean(y, axis=-1, keepdims=True)
    yc = y - mu
    var = jnp.mean(yc * yc, axis=-1, keepdims=True)
    o_ref[...] = (yc * jax.lax.rsqrt(var + LN_EPS) * g_ref[...] + be_ref[...]).astype(o_ref.dtype)


def ffn_fused(x, wi, bi, wf, bf, residual, gamma, beta, out_dtype=jnp.bfloat16):
    M, K = x.shape              # K == HIDDEN
    _, I = wi.shape             # I == INTERMEDIATE
    N = wf.shape[1]             # N == HIDDEN
    # tm kept modest: the f32 intermediate is (tm, 3072) -> 128 rows = 1.5 MiB of live activation.
    tm = _pick_tile(M, 128, 8)
    return pl.pallas_call(
        _ffn_fused_kernel,
        out_shape=jax.ShapeDtypeStruct((M, N), out_dtype),
        grid=(M // tm,),
        in_specs=[
            pl.BlockSpec((tm, K), lambda i: (i, 0)),
            pl.BlockSpec((K, I), lambda i: (0, 0)),
            pl.BlockSpec((1, I), lambda i: (0, 0)),
            pl.BlockSpec((I, N), lambda i: (0, 0)),
            pl.BlockSpec((1, N), lambda i: (0, 0)),
            pl.BlockSpec((tm, N), lambda i: (i, 0)),
            pl.BlockSpec((1, N), lambda i: (0, 0)),
            pl.BlockSpec((1, N), lambda i: (0, 0)),
        ],
        out_specs=pl.BlockSpec((tm, N), lambda i: (i, 0)),
        compiler_params=_cparams("parallel"),
    )(x, wi, bi.reshape(1, I), wf, bf.reshape(1, N), residual, gamma, beta)


def _ln_kernel(x_ref, g_ref, b_ref, o_ref):
    x = x_ref[...].astype(jnp.float32)
    mu = jnp.mean(x, axis=-1, keepdims=True)
    xc = x - mu
    var = jnp.mean(xc * xc, axis=-1, keepdims=True)
    o_ref[...] = (xc * jax.lax.rsqrt(var + LN_EPS) * g_ref[...] + b_ref[...]).astype(o_ref.dtype)


def layernorm(x, gamma, beta, out_dtype=jnp.bfloat16):
    M, H = x.shape
    tm = _pick_tile(M, 512, 8)
    return pl.pallas_call(
        _ln_kernel,
        out_shape=jax.ShapeDtypeStruct((M, H), out_dtype),
        grid=(M // tm,),
        in_specs=[
            pl.BlockSpec((tm, H), lambda i: (i, 0)),
            pl.BlockSpec((1, H), lambda i: (0, 0)),
            pl.BlockSpec((1, H), lambda i: (0, 0)),
        ],
        out_specs=pl.BlockSpec((tm, H), lambda i: (i, 0)),
        compiler_params=_cparams("parallel"),
    )(x, gamma, beta)


def _attn_kernel(q_ref, k_ref, v_ref, m_ref, o_ref, *, scale):
    """softmax(q k^T * scale + additive_mask) @ v for one batch's heads; softmax in f32."""
    q = q_ref[...]
    k = k_ref[...]
    v = v_ref[...]
    s = jnp.einsum("hqd,hkd->hqk", q, k, preferred_element_type=jnp.float32) * scale
    s = s + m_ref[...].astype(jnp.float32)[:, None, :]     # (1,S) -> broadcast over heads/queries
    s = s - jnp.max(s, axis=-1, keepdims=True)
    p = jnp.exp(s)
    p = p * pl.reciprocal(jnp.sum(p, axis=-1, keepdims=True), approx=True)
    o_ref[...] = jnp.einsum("hqk,hkd->hqd", p.astype(v.dtype), v,
                            preferred_element_type=jnp.float32).astype(o_ref.dtype)


def attention(q, k, v, add_mask, batch):
    BH, S, D = q.shape
    nh = BH // batch
    kernel = functools.partial(_attn_kernel, scale=1.0 / (D ** 0.5))
    return pl.pallas_call(
        kernel,
        out_shape=jax.ShapeDtypeStruct((BH, S, D), jnp.bfloat16),
        grid=(batch,),
        in_specs=[
            pl.BlockSpec((nh, S, D), lambda b: (b, 0, 0)),
            pl.BlockSpec((nh, S, D), lambda b: (b, 0, 0)),
            pl.BlockSpec((nh, S, D), lambda b: (b, 0, 0)),
            pl.BlockSpec((1, S), lambda b: (b, 0)),
        ],
        out_specs=pl.BlockSpec((nh, S, D), lambda b: (b, 0, 0)),
        compiler_params=_cparams("parallel"),
    )(q, k, v, add_mask)


def _pool_head_kernel(cls_ref, pw_ref, pb_ref, fw_ref, fb_ref, o_ref):
    """pooled = tanh(cls @ Wp + bp);  prob = sigmoid(sum(pooled * fc_w) + fc_b)."""
    pooled = jnp.dot(cls_ref[...], pw_ref[...], preferred_element_type=jnp.float32)
    pooled = jnp.tanh(pooled + pb_ref[...])
    logit = jnp.sum(pooled * fw_ref[...], axis=-1, keepdims=True) + fb_ref[...]
    o_ref[...] = jax.nn.sigmoid(logit)


def pool_head(cls, pool_w, pool_b, fc_w_row, fc_b):
    B, H = cls.shape
    return pl.pallas_call(
        _pool_head_kernel,
        out_shape=jax.ShapeDtypeStruct((B, 1), jnp.float32),
        grid=(1,),
        in_specs=[
            pl.BlockSpec((B, H), lambda i: (0, 0)),
            pl.BlockSpec((H, H), lambda i: (0, 0)),
            pl.BlockSpec((1, H), lambda i: (0, 0)),
            pl.BlockSpec((1, H), lambda i: (0, 0)),
            pl.BlockSpec((1, 1), lambda i: (0, 0)),
        ],
        out_specs=pl.BlockSpec((B, 1), lambda i: (0, 0)),
        compiler_params=_cparams("arbitrary"),
    )(cls, pool_w, pool_b, fc_w_row, fc_b)


# ----------------- parameters -----------------
def init_params(key):
    keys = iter(jax.random.split(key, 64))

    def w(shape, dtype=jnp.bfloat16):
        return (0.02 * jax.random.normal(next(keys), shape)).astype(dtype)

    def zeros(*shape):
        return jnp.zeros(shape, jnp.float32)

    def ones(*shape):
        return jnp.ones(shape, jnp.float32)

    params = {
        "word_emb": w((VOCAB, HIDDEN), jnp.float32),
        "pos_emb": w((MAX_POS, HIDDEN), jnp.float32),
        "type_emb": w((2, HIDDEN), jnp.float32),
        "emb_ln_g": ones(1, HIDDEN),
        "emb_ln_b": zeros(1, HIDDEN),
        "layers": [],
        "pool_w": w((HIDDEN, HIDDEN)),           # bf16
        "pool_b": zeros(1, HIDDEN),
        "fc_w_row": w((1, HIDDEN), jnp.float32),  # Linear(768,1) weight stored as a row
        "fc_b": zeros(1, 1),
    }
    for _ in range(NUM_LAYERS):
        params["layers"].append({
            # fused Q|K|V projection
            "w_qkv": w((HIDDEN, 3 * HIDDEN)), "b_qkv": zeros(3 * HIDDEN),
            "wo": w((HIDDEN, HIDDEN)), "bo": zeros(HIDDEN),
            "ln1_g": ones(1, HIDDEN), "ln1_b": zeros(1, HIDDEN),
            "wi": w((HIDDEN, INTERMEDIATE)), "bi": zeros(INTERMEDIATE),
            "wf": w((INTERMEDIATE, HIDDEN)), "bf": zeros(HIDDEN),
            "ln2_g": ones(1, HIDDEN), "ln2_b": zeros(1, HIDDEN),
        })
    return params


# ----------------- forward pass -----------------
def contract_classifier_forward(params, ids, mask):
    """Equivalent of ContractClassifier.forward(ids, mask) -> sigmoid(fc(pooled_output))."""
    B, S = ids.shape

    # --- embeddings (gathers/adds are JAX glue; LayerNorm is a Pallas kernel) ---
    we = jnp.take(params["word_emb"], ids, axis=0)                  # (B,S,H) f32
    pe = params["pos_emb"][:S][None, :, :]                          # (1,S,H)
    te = params["type_emb"][0][None, None, :]                       # (1,1,H)
    x = (we + pe + te).reshape(B * S, HIDDEN)
    h = layernorm(x, params["emb_ln_g"], params["emb_ln_b"])        # (B*S, H) bf16

    # --- compact additive attention mask: (1 - mask) * -10000, one row per batch ---
    add_mask = (1.0 - mask.astype(jnp.float32)) * -10000.0          # (B, S) f32

    def split_heads(t):   # (B*S,H) -> (B*NH, S, Dh)
        return t.reshape(B, S, NUM_HEADS, HEAD_DIM).transpose(0, 2, 1, 3).reshape(
            B * NUM_HEADS, S, HEAD_DIM)

    def merge_heads(t):   # (B*NH, S, Dh) -> (B*S, H)
        return t.reshape(B, NUM_HEADS, S, HEAD_DIM).transpose(0, 2, 1, 3).reshape(
            B * S, HIDDEN)

    # --- transformer encoder layers (dropout is a no-op in inference) ---
    for lp in params["layers"]:
        qkv = dense(h, lp["w_qkv"], lp["b_qkv"])                    # (B*S, 3H) bf16
        q = qkv[:, :HIDDEN]
        k = qkv[:, HIDDEN:2 * HIDDEN]
        v = qkv[:, 2 * HIDDEN:]
        ctx = attention(split_heads(q), split_heads(k), split_heads(v), add_mask, B)
        # attn output projection fused with bias + residual + LayerNorm
        h = dense_add_ln(merge_heads(ctx), lp["wo"], lp["bo"], h, lp["ln1_g"], lp["ln1_b"])
        # FFN: up-proj + GELU + down-proj + bias + residual + LayerNorm all in one kernel
        h = ffn_fused(h, lp["wi"], lp["bi"], lp["wf"], lp["bf"], h, lp["ln2_g"], lp["ln2_b"])

    # --- pooler + classifier head fused: sigmoid(fc(tanh(W_p * CLS + b_p))) ---
    seq_out = h.reshape(B, S, HIDDEN)
    cls = seq_out[:, 0, :]                                          # (B, H) bf16
    probs = pool_head(cls, params["pool_w"], params["pool_b"],
                      params["fc_w_row"], params["fc_b"])           # (B, 1) f32
    return probs


# ----------------- demo -----------------
if __name__ == "__main__":
    key = jax.random.PRNGKey(0)
    k_param, k_ids = jax.random.split(key)

    params = init_params(k_param)

    B, S = 2, 8
    ids = jax.random.randint(k_ids, (B, S), 0, VOCAB, dtype=jnp.int32)
    mask = jnp.array([[1, 1, 1, 1, 1, 1, 1, 1],
                      [1, 1, 1, 1, 1, 0, 0, 0]], dtype=jnp.int32)

    out = contract_classifier_forward(params, ids, mask)
    out = jax.block_until_ready(out)

    assert out.shape == (B, 1) and out.dtype == jnp.float32
    assert bool(jnp.all((out > 0.0) & (out < 1.0)))
    print("KERNEL_OK")
</pallas_src>

<mosaic_0001>
module attributes {stable_mosaic.version = 11 : i64} {
  func.func @_ln_kernel(%arg0: i32, %arg1: memref<16x768xf32, #tpu.memory_space<vmem>>, %arg2: memref<1x768xf32, #tpu.memory_space<vmem>>, %arg3: memref<1x768xf32, #tpu.memory_space<vmem>>, %arg4: memref<16x768xbf16, #tpu.memory_space<vmem>>) attributes {dimension_semantics = [#tpu.dimension_semantics<parallel>], iteration_bounds = array<i64: 1>, scalar_prefetch = 0 : i64, scratch_operands = 0 : i64, tpu.core_type = #tpu.core_type<tc>, window_params = [{transform_indices = @transform_0, window_bounds = array<i64: 16, 768>}, {pipeline_mode = #tpu.pipeline_mode<synchronous>, transform_indices = @transform_1, window_bounds = array<i64: 1, 768>}, {pipeline_mode = #tpu.pipeline_mode<synchronous>, transform_indices = @transform_2, window_bounds = array<i64: 1, 768>}, {transform_indices = @transform_3, window_bounds = array<i64: 16, 768>}]} {
    %c0 = arith.constant 0 : index
    %c0_0 = arith.constant 0 : index
    %0 = vector.load %arg1[%c0, %c0_0] : memref<16x768xf32, #tpu.memory_space<vmem>>, vector<16x768xf32>
    %cst = arith.constant dense<0.000000e+00> : vector<16xf32>
    %1 = vector.multi_reduction <add>, %0, %cst [1] : vector<16x768xf32> to vector<16xf32>
    %2 = vector.shape_cast %1 : vector<16xf32> to vector<16x1xf32>
    %cst_1 = arith.constant 7.680000e+02 : f32
    %3 = vector.broadcast %cst_1 : f32 to vector<16x1xf32>
    %4 = arith.divf %2, %3 : vector<16x1xf32>
    %5 = vector.broadcast %4 : vector<16x1xf32> to vector<16x768xf32>
    %6 = arith.subf %0, %5 : vector<16x768xf32>
    %7 = arith.mulf %6, %6 : vector<16x768xf32>
    %cst_2 = arith.constant dense<0.000000e+00> : vector<16xf32>
    %8 = vector.multi_reduction <add>, %7, %cst_2 [1] : vector<16x768xf32> to vector<16xf32>
    %9 = vector.shape_cast %8 : vector<16xf32> to vector<16x1xf32>
    %cst_3 = arith.constant 7.680000e+02 : f32
    %10 = vector.broadcast %cst_3 : f32 to vector<16x1xf32>
    %11 = arith.divf %9, %10 : vector<16x1xf32>
    %cst_4 = arith.constant 9.99999996E-13 : f32
    %12 = vector.broadcast %cst_4 : f32 to vector<16x1xf32>
    %13 = arith.addf %11, %12 : vector<16x1xf32>
    %14 = math.rsqrt %13 : vector<16x1xf32>
    %15 = vector.broadcast %14 : vector<16x1xf32> to vector<16x768xf32>
    %16 = arith.mulf %6, %15 : vector<16x768xf32>
    %c0_5 = arith.constant 0 : index
    %c0_6 = arith.constant 0 : index
    %17 = vector.load %arg2[%c0_5, %c0_6] : memref<1x768xf32, #tpu.memory_space<vmem>>, vector<1x768xf32>
    %18 = vector.broadcast %17 : vector<1x768xf32> to vector<16x768xf32>
    %19 = arith.mulf %16, %18 : vector<16x768xf32>
    %c0_7 = arith.constant 0 : index
    %c0_8 = arith.constant 0 : index
    %20 = vector.load %arg3[%c0_7, %c0_8] : memref<1x768xf32, #tpu.memory_space<vmem>>, vector<1x768xf32>
    %21 = vector.broadcast %20 : vector<1x768xf32> to vector<16x768xf32>
    %22 = arith.addf %19, %21 : vector<16x768xf32>
    %23 = arith.truncf %22 : vector<16x768xf32> to vector<16x768xbf16>
    %c0_9 = arith.constant 0 : index
    %c0_10 = arith.constant 0 : index
    %24 = vector.load %arg4[%c0_9, %c0_10] : memref<16x768xbf16, #tpu.memory_space<vmem>>, vector<16x768xbf16>
    tpu.vector_store %arg4[%c0_9, %c0_10], %23 {strides = array<i32>} : memref<16x768xbf16, #tpu.memory_space<vmem>>, vector<16x768xbf16>,
    return
  }
  func.func @transform_0(%arg0: i32) -> (i32, i32) {
    %c0_i32 = arith.constant 0 : i32
    %c0_i32_0 = arith.constant 0 : i32
    return %arg0, %c0_i32 : i32, i32
  }
  func.func @transform_1(%arg0: i32) -> (i32, i32) {
    %c0_i32 = arith.constant 0 : i32
    %c0_i32_0 = arith.constant 0 : i32
    %c0_i32_1 = arith.constant 0 : i32
    return %c0_i32, %c0_i32_0 : i32, i32
  }
  func.func @transform_2(%arg0: i32) -> (i32, i32) {
    %c0_i32 = arith.constant 0 : i32
    %c0_i32_0 = arith.constant 0 : i32
    %c0_i32_1 = arith.constant 0 : i32
    return %c0_i32, %c0_i32_0 : i32, i32
  }
  func.func @transform_3(%arg0: i32) -> (i32, i32) {
    %c0_i32 = arith.constant 0 : i32
    %c0_i32_0 = arith.constant 0 : i32
    return %arg0, %c0_i32 : i32, i32
  }
}

</mosaic_0001>

<llo_original>
// kernel: tpu_custom_call.1
$region0: #{tpu_custom_call.1}
  #allocation0 [shape = 'u32[]', space=smem, size = 0x4, offset = 0x4, fixed_abs, tag = 'smem constant byte address 0x4 - core index']
  #allocation1 [shape = 'u32[144,128]{1,0:T(1,128)}', space=vmem, size = 0x12000, scoped, tag = 'internal scratch']
  %s0 = inlined_call_operand.hbm [shape: f32[16,768], index: 0, kind: input, shape index: {}]
  %s1 = inlined_call_operand.hbm [shape: f32[1,768], index: 1, kind: input, shape index: {}]
  %s2 = inlined_call_operand.vmem [shape: f32[1,768], index: 2, kind: input, shape index: {}]
  %s3 = inlined_call_operand.hbm [shape: bf16[16,768], index: 3, kind: output, shape index: {}]
  %s4 = sld [smem:[#allocation0]]
  $region30: #{tpu_custom_call.1} parent=0
    _
  %s6 = ssub.s32 1, %s4
  %s7 = scalar_select 0, %s6, %s4
  $region1: #{tpu_custom_call.1} parent=0
    #allocation2 [shape = 'u8[49152]{0}', space=vmem, size = 0xc000, scoped, tag = 'input window, operand 0, single buffered']
    #allocation3 [shape = 's32[1]{0}', space=sflag, size = 0x4, scoped, tag = 'scoped memory for tpu_custom_call.1']
    #allocation4 [shape = 's32[1]{0}', space=sflag, size = 0x4, scoped, tag = 'scoped memory for tpu_custom_call.1']
    #allocation5 [shape = 'u8[3072]{0}', space=vmem, size = 0xc00, scoped, tag = 'input window, operand 1, single buffered']
    #allocation6 [shape = 's32[1]{0}', space=sflag, size = 0x4, scoped, tag = 'scoped memory for tpu_custom_call.1']
    #allocation7 [shape = 'u8[24576]{0}', space=vmem, size = 0x6000, scoped, tag = 'output window, operand 0, single buffered']
    %8 = vsyncpa [#allocation3], 0
    %9 = vsyncpa [#allocation6], 0
    %10 = vsyncpa [#allocation4], 0
    // Predicated region
    $region2: #{tpu_custom_call.1} parent=1 // pred_check
      _
    $region3: #{tpu_custom_call.1} parent=1 // pred_check_branch
      %12 = sbr.rel (0) target = $region5
    $region4: #{tpu_custom_call.1} parent=1 // pred_region
      %s14 = ssub.s32 1536, 1536
      %15 = vsyncadd [#allocation3], %s14
      %s16 = sshll.u32 [#allocation2], 4
      %s17 = int_to_ptr.vmem [resolvable:$true] %s16
      %22 = dma.hbm_to_vmem [thread:$0]  %s0, 1536, %s17, [#allocation3], 768, 768, 48
    $region5: #{tpu_custom_call.1} parent=1 // pred_fallthru
      _
    // Predicated region
    $region6: #{tpu_custom_call.1} parent=1 // pred_check
      _
    $region7: #{tpu_custom_call.1} parent=1 // pred_check_branch
      %24 = sbr.rel (0) target = $region9
    $region8: #{tpu_custom_call.1} parent=1 // pred_region
      %s26 = ssub.s32 96, 96
      %27 = vsyncadd [#allocation6], %s26
      %s29 = sshll.u32 [#allocation5], 4
      %s30 = int_to_ptr.vmem [resolvable:$true] %s29
      %32 = dma.hbm_to_vmem [thread:$0]  %s1, 96, %s30, [#allocation6]
    $region9: #{tpu_custom_call.1} parent=1 // pred_fallthru
      _
    // Predicated region
    $region10: #{tpu_custom_call.1} parent=1 // pred_check
      _
    $region11: #{tpu_custom_call.1} parent=1 // pred_check_branch
      %34 = sbr.rel (0) target = $region13
    $region12: #{tpu_custom_call.1} parent=1 // pred_region
      _
    $region13: #{tpu_custom_call.1} parent=1 // pred_fallthru
      _
    // Predicated region
    $region14: #{tpu_custom_call.1} parent=1 // pred_check
      _
    $region15: #{tpu_custom_call.1} parent=1 // pred_check_branch
      %36 = sbr.rel (0) target = $region17
    $region16: #{tpu_custom_call.1} parent=1 // pred_region
      %37 = dma.done [#allocation3], 1536
    $region17: #{tpu_custom_call.1} parent=1 // pred_fallthru
      _
    // Predicated region
    $region18: #{tpu_custom_call.1} parent=1 // pred_check
      _
    $region19: #{tpu_custom_call.1} parent=1 // pred_check_branch
      %39 = sbr.rel (0) target = $region21
    $region20: #{tpu_custom_call.1} parent=1 // pred_region
      %40 = dma.done [#allocation6], 96
    $region21: #{tpu_custom_call.1} parent=1 // pred_fallthru
      _
    %v41 = vld [vmem:[#allocation2] sm:$0xff]
    %v42 = vld [vmem:[#allocation2 + $0x8] sm:$0xff]
    %v43 = vld [vmem:[#allocation2 + $0x10] sm:$0xff]
    %v44 = vld [vmem:[#allocation2 + $0x18] sm:$0xff]
    %v45 = vld [vmem:[#allocation2 + $0x20] sm:$0xff]
    %v46 = vld [vmem:[#allocation2 + $0x28] sm:$0xff]
    %v47 = vld [vmem:[#allocation2 + $0x30] sm:$0xff]
    %v48 = vld [vmem:[#allocation2 + $0x38] sm:$0xff]
    %v49 = vld [vmem:[#allocation2 + $0x40] sm:$0xff]
    %v50 = vld [vmem:[#allocation2 + $0x48] sm:$0xff]
    %v51 = vld [vmem:[#allocation2 + $0x50] sm:$0xff]
    %v52 = vld [vmem:[#allocation2 + $0x58] sm:$0xff]
    %v53 = vadd.f32 %v41, %v42
    %v54 = vadd.f32 %v53, %v43
    %v55 = vadd.f32 %v54, %v44
    %v56 = vadd.f32 %v55, %v45
    %v57 = vadd.f32 %v56, %v46
    %58 = vadd.xlane.f32.xlu0 %v57
    %v59 = vpop.xlane.xlu0 %58
    %v60 = vadd.f32 %v47, %v48
    %v61 = vadd.f32 %v60, %v49
    %v62 = vadd.f32 %v61, %v50
    %v63 = vadd.f32 %v62, %v51
    %v64 = vadd.f32 %v63, %v52
    %65 = vadd.xlane.f32.xlu0 %v64
    %v66 = vpop.xlane.xlu0 %65
    %v67 = vrcp.pop 768.0
    %v68 = vmul.f32 %v59, %v67
    %v69 = vmul.f32 %v66, %v67
    %v70 = vsub.f32 %v41, %v68
    %v71 = vsub.f32 %v42, %v68
    %v72 = vsub.f32 %v43, %v68
    %v73 = vsub.f32 %v44, %v68
    %v74 = vsub.f32 %v45, %v68
    %v75 = vsub.f32 %v46, %v68
    %v76 = vsub.f32 %v47, %v69
    %v77 = vsub.f32 %v48, %v69
    %v78 = vsub.f32 %v49, %v69
    %v79 = vsub.f32 %v50, %v69
    %v80 = vsub.f32 %v51, %v69
    %v81 = vsub.f32 %v52, %v69
    %v82 = vmul.f32 %v70, %v70
    %v83 = vmul.f32 %v71, %v71
    %v84 = vmul.f32 %v72, %v72
    %v85 = vmul.f32 %v73, %v73
    %v86 = vmul.f32 %v74, %v74
    %v87 = vmul.f32 %v75, %v75
    %v88 = vmul.f32 %v76, %v76
    %v89 = vmul.f32 %v77, %v77
    %v90 = vmul.f32 %v78, %v78
    %v91 = vmul.f32 %v79, %v79
    %v92 = vmul.f32 %v80, %v80
    %v93 = vmul.f32 %v81, %v81
    %v94 = vadd.f32 %v82, %v83
    %v95 = vadd.f32 %v94, %v84
    %v96 = vadd.f32 %v95, %v85
    %v97 = vadd.f32 %v96, %v86
    %v98 = vadd.f32 %v97, %v87
    %99 = vadd.xlane.f32.xlu0 %v98
    %v100 = vpop.xlane.xlu0 %99
    %v101 = vadd.f32 %v88, %v89
    %v102 = vadd.f32 %v101, %v90
    %v103 = vadd.f32 %v102, %v91
    %v104 = vadd.f32 %v103, %v92
    %v105 = vadd.f32 %v104, %v93
    %106 = vadd.xlane.f32.xlu0 %v105
    %v107 = vpop.xlane.xlu0 %106
    %v108 = vmul.f32 %v100, %v67
    %v109 = vmul.f32 %v107, %v67
    %v110 = vadd.f32 %v108, 1e-12
    %v111 = vadd.f32 %v109, 1e-12
    %v112 = vrsqrt.pop %v110
    %v113 = vrsqrt.pop %v111
    %v114 = vmul.f32 %v70, %v112
    %v115 = vmul.f32 %v71, %v112
    %v116 = vmul.f32 %v72, %v112
    %v117 = vmul.f32 %v73, %v112
    %v118 = vmul.f32 %v74, %v112
    %v119 = vmul.f32 %v75, %v112
    %v120 = vmul.f32 %v76, %v113
    %v121 = vmul.f32 %v77, %v113
    %v122 = vmul.f32 %v78, %v113
    %v123 = vmul.f32 %v79, %v113
    %v124 = vmul.f32 %v80, %v113
    %v125 = vmul.f32 %v81, %v113
    %v126 = vld [vmem:[#allocation5] sm:$0x3f]
    %v128 = vlaneseq
    %v129 = vshrl.u32 %v128, 7
    %v130 = vsub.s32 0, %v129
    %v131 = vrot.slane %v126, %v130
    %v132 = vlaneseq
    %v133 = vshrl.u32 %v132, 7
    %v134 = vsub.s32 1, %v133
    %v135 = vrot.slane %v126, %v134
    %v136 = vlaneseq
    %v137 = vshrl.u32 %v136, 7
    %v138 = vsub.s32 2, %v137
    %v139 = vrot.slane %v126, %v138
    %v140 = vlaneseq
    %v141 = vshrl.u32 %v140, 7
    %v142 = vsub.s32 3, %v141
    %v143 = vrot.slane %v126, %v142
    %v144 = vlaneseq
    %v145 = vshrl.u32 %v144, 7
    %v146 = vsub.s32 4, %v145
    %v147 = vrot.slane %v126, %v146
    %v148 = vlaneseq
    %v149 = vshrl.u32 %v148, 7
    %v150 = vsub.s32 5, %v149
    %v151 = vrot.slane %v126, %v150
    %v158 = vmul.f32 %v114, %v131
    %v159 = vmul.f32 %v115, %v135
    %v160 = vmul.f32 %v116, %v139
    %v161 = vmul.f32 %v117, %v143
    %v162 = vmul.f32 %v118, %v147
    %v163 = vmul.f32 %v119, %v151
    %v164 = vmul.f32 %v120, %v131
    %v165 = vmul.f32 %v121, %v135
    %v166 = vmul.f32 %v122, %v139
    %v167 = vmul.f32 %v123, %v143
    %v168 = vmul.f32 %v124, %v147
    %v169 = vmul.f32 %v125, %v151
    %v170 = vld [vmem:[%s2] sm:$0x3f]
    %v172 = vlaneseq
    %v173 = vshrl.u32 %v172, 7
    %v174 = vsub.s32 0, %v173
    %v175 = vrot.slane %v170, %v174
    %v176 = vlaneseq
    %v177 = vshrl.u32 %v176, 7
    %v178 = vsub.s32 1, %v177
    %v179 = vrot.slane %v170, %v178
    %v180 = vlaneseq
    %v181 = vshrl.u32 %v180, 7
    %v182 = vsub.s32 2, %v181
    %v183 = vrot.slane %v170, %v182
    %v184 = vlaneseq
    %v185 = vshrl.u32 %v184, 7
    %v186 = vsub.s32 3, %v185
    %v187 = vrot.slane %v170, %v186
    %v188 = vlaneseq
    %v189 = vshrl.u32 %v188, 7
    %v190 = vsub.s32 4, %v189
    %v191 = vrot.slane %v170, %v190
    %v192 = vlaneseq
    %v193 = vshrl.u32 %v192, 7
    %v194 = vsub.s32 5, %v193
    %v195 = vrot.slane %v170, %v194
    %v202 = vadd.f32 %v158, %v175
    %v203 = vadd.f32 %v159, %v179
    %v204 = vadd.f32 %v160, %v183
    %v205 = vadd.f32 %v161, %v187
    %v206 = vadd.f32 %v162, %v191
    %v207 = vadd.f32 %v163, %v195
    %v208 = vadd.f32 %v164, %v175
    %v209 = vadd.f32 %v165, %v179
    %v210 = vadd.f32 %v166, %v183
    %v211 = vadd.f32 %v167, %v187
    %v212 = vadd.f32 %v168, %v191
    %v213 = vadd.f32 %v169, %v195
    %v214 = vpack.c.bf16 %v208, %v202
    %v215 = vpack.c.bf16 %v209, %v203
    %v216 = vpack.c.bf16 %v210, %v204
    %v217 = vpack.c.bf16 %v211, %v205
    %v218 = vpack.c.bf16 %v212, %v206
    %v219 = vpack.c.bf16 %v213, %v207
    %v226 = vunpack.c.l.b16 %v214
    %v227 = vunpack.c.l.b16 %v215
    %v228 = vunpack.c.l.b16 %v216
    %v229 = vunpack.c.l.b16 %v217
    %v230 = vunpack.c.l.b16 %v218
    %v231 = vunpack.c.l.b16 %v219
    %v232 = vunpack.c.h.b16 %v214
    %v233 = vunpack.c.h.b16 %v215
    %v234 = vunpack.c.h.b16 %v216
    %v235 = vunpack.c.h.b16 %v217
    %v236 = vunpack.c.h.b16 %v218
    %v237 = vunpack.c.h.b16 %v219
    %v238 = vpack.c.b16 %v227, %v226
    %v239 = vpack.c.b16 %v229, %v228
    %v240 = vpack.c.b16 %v231, %v230
    %v241 = vpack.c.b16 %v233, %v232
    %v242 = vpack.c.b16 %v235, %v234
    %v243 = vpack.c.b16 %v237, %v236
    %250 = vst [vmem:[#allocation7] sm:$0xff] %v238
    %251 = vst [vmem:[#allocation7 + $0x8] sm:$0xff] %v239
    %252 = vst [vmem:[#allocation7 + $0x10] sm:$0xff] %v240
    %253 = vst [vmem:[#allocation7 + $0x18] sm:$0xff] %v241
    %254 = vst [vmem:[#allocation7 + $0x20] sm:$0xff] %v242
    %255 = vst [vmem:[#allocation7 + $0x28] sm:$0xff] %v243
    // Predicated region
    $region22: #{tpu_custom_call.1} parent=1 // pred_check
      _
    $region23: #{tpu_custom_call.1} parent=1 // pred_check_branch
      %257 = sbr.rel (0) target = $region25
    $region24: #{tpu_custom_call.1} parent=1 // pred_region
      %s259 = ssub.s32 768, 768
      %260 = vsyncadd [#allocation4], %s259
      %s261 = sshll.u32 [#allocation7], 4
      %s262 = int_to_ptr.vmem [resolvable:$true] %s261
      %267 = dma.vmem_to_hbm [thread:$0]  %s262, 768, %s3, [#allocation4], 384, 384, 24
    $region25: #{tpu_custom_call.1} parent=1 // pred_fallthru
      _
    // Predicated region
    $region26: #{tpu_custom_call.1} parent=1 // pred_check
      _
    $region27: #{tpu_custom_call.1} parent=1 // pred_check_branch
      %269 = sbr.rel (0) target = $region29
    $region28: #{tpu_custom_call.1} parent=1 // pred_region
      %270 = dma.done [#allocation4], 768
    $region29: #{tpu_custom_call.1} parent=1 // pred_fallthru
      _
    %271 = vsyncpa [#allocation3], 1
    %272 = vsyncpa [#allocation6], 1
    %273 = vsyncpa [#allocation4], 1

</llo_original>
